<compile_context>
chip_gen: v5e
topology: v5e:2x2
jax: 0.10.0
libtpu: 0.0.40
codegen_flags: <defaults>
</compile_context>

<pallas_src>
import jax
import jax.numpy as jnp
from jax import lax
from jax.experimental import pallas as pl
from jax.experimental.pallas import tpu as pltpu

N_CLASS = 16    # vocabulary size (n_class)
N_HIDDEN = 32   # RNN hidden size (n_hidden)
N_STEP = 8      # sequence length (encoder and decoder, as in the tutorial)


def attention_kernel(enc_ref, dec_ref, h0_ref, w_in_ref, w_h_ref, w_out_ref,
                     out_ref, enc_h_ref, dec_h_ref):
    f32 = jnp.float32
    T, C, H = N_STEP, N_CLASS, N_HIDDEN

    # ---- per-batch-element inputs (grid axis b already selected by BlockSpec) ----
    enc_in = enc_ref[...]            # [T, C]
    dec_in = dec_ref[...]            # [T, C]
    h = h0_ref[...]                  # [1, H] initial hidden state

    # ---- unpack packed weight slabs (all segment starts are 8-row aligned) ----
    w_in = w_in_ref[0:C, :]          # [C, 2H]  lanes 0:H -> enc W_ih^T, H:2H -> dec W_ih^T
    b_in = w_in_ref[C:C + 1, :]      # [1, 2H]  fused (b_ih + b_hh) biases, enc | dec

    enc_whh = w_h_ref[0:H, :]              # [H, H]
    dec_whh = w_h_ref[H:2 * H, :]          # [H, H]
    attn_w = w_h_ref[2 * H:3 * H, :]       # [H, H]  attn.weight^T
    attn_b = w_h_ref[3 * H:3 * H + 1, :]   # [1, H]

    out_w = w_out_ref[0:2 * H, :]              # [2H, C]  out.weight^T
    out_b = w_out_ref[2 * H:2 * H + 1, :]      # [1, C]

    # ---- fused, hoisted input projections: one MXU op for both RNNs ----
    seq = jnp.concatenate([enc_in, dec_in], axis=0)                     # [2T, C]
    y = jnp.dot(seq, w_in, preferred_element_type=f32) + b_in           # [2T, 2H]
    enc_x = y[0:T, 0:H]                                                 # [T, H]
    dec_x = y[T:2 * T, H:2 * H]                                         # [T, H]

    # ---- encoder recurrence: only h @ W_hh + add + tanh on the serial path ----
    for t in range(T):
        h = jnp.tanh(enc_x[t:t + 1, :]
                     + jnp.dot(h, enc_whh, preferred_element_type=f32))
        enc_h_ref[t:t + 1, :] = h

    # ---- decoder recurrence (hidden states only; attention is batched below) ----
    for i in range(T):
        h = jnp.tanh(dec_x[i:i + 1, :]
                     + jnp.dot(h, dec_whh, preferred_element_type=f32))
        dec_h_ref[i:i + 1, :] = h

    enc_out = enc_h_ref[...]          # [T, H]
    h_dec = dec_h_ref[...]            # [T, H]

    # ---- batched attention over all decoder steps ----
    enc_att = jnp.dot(enc_out, attn_w, preferred_element_type=f32) + attn_b   # [T, H]
    # scores[q, k] = <h_dec[q], enc_att[k]>  (contract last dims; no explicit .T)
    scores = lax.dot_general(h_dec, enc_att,
                             dimension_numbers=(((1,), (1,)), ((), ())),
                             preferred_element_type=f32)                      # [T, T]
    m = jnp.max(scores, axis=-1, keepdims=True)
    e = jnp.exp(scores - m)
    p = e / jnp.sum(e, axis=-1, keepdims=True)                                # [T, T] exact

    context = jnp.dot(p, enc_out, preferred_element_type=f32)                 # [T, H]

    # ---- fused output projection: one [T,2H]@[2H,C] matmul ----
    cat = jnp.concatenate([h_dec, context], axis=-1)                          # [T, 2H]
    logits = jnp.dot(cat, out_w, preferred_element_type=f32) + out_b          # [T, C]

    # ---- single packed output store: [T, C | T] ----
    out_ref[...] = jnp.concatenate([logits, p], axis=-1)


def init_params(key):
    ks = jax.random.split(key, 10)
    s = 0.1

    def rnd(k, shape):
        return (s * jax.random.normal(k, shape)).astype(jnp.float32)

    return dict(
        enc_wih_t=rnd(ks[0], (N_CLASS, N_HIDDEN)),
        enc_whh_t=rnd(ks[1], (N_HIDDEN, N_HIDDEN)),
        enc_b=rnd(ks[2], (1, N_HIDDEN)),          # b_ih + b_hh folded together
        dec_wih_t=rnd(ks[3], (N_CLASS, N_HIDDEN)),
        dec_whh_t=rnd(ks[4], (N_HIDDEN, N_HIDDEN)),
        dec_b=rnd(ks[5], (1, N_HIDDEN)),
        attn_w_t=rnd(ks[6], (N_HIDDEN, N_HIDDEN)),
        attn_b=rnd(ks[7], (1, N_HIDDEN)),
        out_w_t=rnd(ks[8], (2 * N_HIDDEN, N_CLASS)),   # rows 0:H -> dec_output, H:2H -> context
        out_b=rnd(ks[9], (1, N_CLASS)),
    )


def pack_params(p):
    """Pack the 10 small tensors into three contiguous fp32 slabs.
    Done once at setup time; every segment starts on an 8-row (sublane) boundary."""
    C, H = N_CLASS, N_HIDDEN
    zeros = lambda r, c: jnp.zeros((r, c), jnp.float32)

    # Fused input-projection slab: [C + 8, 2H]
    w_in = jnp.concatenate([p["enc_wih_t"], p["dec_wih_t"]], axis=1)   # [C, 2H]
    b_in = jnp.concatenate([p["enc_b"], p["dec_b"]], axis=1)           # [1, 2H]
    w_in_buf = jnp.concatenate([w_in, b_in, zeros(7, 2 * H)], axis=0)  # [24, 64]

    # Hidden-sized slab: [3H + 8, H]; segments at rows 0, H, 2H, 3H.
    w_h_buf = jnp.concatenate([p["enc_whh_t"], p["dec_whh_t"], p["attn_w_t"],
                               p["attn_b"], zeros(7, H)], axis=0)      # [104, 32]

    # Output-projection slab: [2H + 8, C]; segments at rows 0, 2H.
    w_out_buf = jnp.concatenate([p["out_w_t"], p["out_b"], zeros(7, C)], axis=0)  # [72, 16]

    return {"w_in": w_in_buf, "w_h": w_h_buf, "w_out": w_out_buf}


@jax.jit
def attention_forward(enc_inputs, hidden, dec_inputs, packed):
    """enc_inputs: [B, T, C], hidden: [1, B, H], dec_inputs: [B, T, C].
    Returns (model [B, T, C], trained_attn [B, T, T]) — the batched analogue of the
    PyTorch forward (trained_attn is stacked instead of a Python list)."""
    B, T, C = enc_inputs.shape
    H = N_HIDDEN

    enc = enc_inputs.astype(jnp.float32)                 # [B, T, C]
    dec = dec_inputs.astype(jnp.float32)                 # [B, T, C]
    h0 = jnp.swapaxes(hidden, 0, 1).astype(jnp.float32)  # [B, 1, H]

    out = pl.pallas_call(
        attention_kernel,
        out_shape=jax.ShapeDtypeStruct((B, T, C + T), jnp.float32),
        grid_spec=pltpu.PrefetchScalarGridSpec(
            num_scalar_prefetch=0,
            grid=(B,),
            in_specs=[
                pl.BlockSpec((None, T, C), lambda b: (b, 0, 0)),      # enc
                pl.BlockSpec((None, T, C), lambda b: (b, 0, 0)),      # dec
                pl.BlockSpec((None, 1, H), lambda b: (b, 0, 0)),      # h0
                pl.BlockSpec(packed["w_in"].shape, lambda b: (0, 0)),  # fused W_ih slab
                pl.BlockSpec(packed["w_h"].shape, lambda b: (0, 0)),   # W_hh / attn slab
                pl.BlockSpec(packed["w_out"].shape, lambda b: (0, 0)),  # out-proj slab
            ],
            out_specs=pl.BlockSpec((None, T, C + T), lambda b: (b, 0, 0)),
            scratch_shapes=[pltpu.VMEM((T, H), jnp.float32),   # encoder hidden states
                            pltpu.VMEM((T, H), jnp.float32)],  # decoder hidden states
        ),
        compiler_params=pltpu.CompilerParams(
            dimension_semantics=("parallel",)),
    )(enc, dec, h0, packed["w_in"], packed["w_h"], packed["w_out"])

    model = out[:, :, :C]           # [B, T, C]
    trained_attn = out[:, :, C:]    # [B, T, T]
    return model, trained_attn


def reference_forward(enc_inputs, hidden, dec_inputs, p):
    """Pure-JAX reference mirroring the PyTorch forward, looped over the batch."""
    def single(enc, dec, h):
        T = enc.shape[0]
        enc_outs = []
        for t in range(T):
            h = jnp.tanh(enc[t:t + 1] @ p["enc_wih_t"] + h @ p["enc_whh_t"] + p["enc_b"])
            enc_outs.append(h)
        enc_out = jnp.concatenate(enc_outs, axis=0)

        model_rows, attn_rows = [], []
        for i in range(T):
            h = jnp.tanh(dec[i:i + 1] @ p["dec_wih_t"] + h @ p["dec_whh_t"] + p["dec_b"])
            enc_att = enc_out @ p["attn_w_t"] + p["attn_b"]
            scores = (h @ enc_att.T)[0]
            attn = jax.nn.softmax(scores)
            context = attn[None, :] @ enc_out
            cat = jnp.concatenate([h, context], axis=1)
            model_rows.append((cat @ p["out_w_t"] + p["out_b"])[0])
            attn_rows.append(attn)
        return jnp.stack(model_rows), jnp.stack(attn_rows)

    models, attns = [], []
    for b in range(enc_inputs.shape[0]):
        m, a = single(enc_inputs[b].astype(jnp.float32),
                      dec_inputs[b].astype(jnp.float32),
                      hidden[0, b:b + 1].astype(jnp.float32))
        models.append(m)
        attns.append(a)
    return jnp.stack(models), jnp.stack(attns)


if __name__ == "__main__":
    key = jax.random.PRNGKey(0)
    k_enc, k_dec, k_h, k_params = jax.random.split(key, 4)

    B = 4  # batch of independent sequences; one grid step each ("parallel" axis)
    enc_inputs = jax.random.normal(k_enc, (B, N_STEP, N_CLASS), dtype=jnp.float32)
    dec_inputs = jax.random.normal(k_dec, (B, N_STEP, N_CLASS), dtype=jnp.float32)
    hidden = jax.random.normal(k_h, (1, B, N_HIDDEN), dtype=jnp.float32)

    params = init_params(k_params)
    packed = pack_params(params)

    model, trained_attn = attention_forward(enc_inputs, hidden, dec_inputs, packed)
    model = jax.block_until_ready(model)
    trained_attn = jax.block_until_ready(trained_attn)

    ref_model, ref_attn = reference_forward(enc_inputs, hidden, dec_inputs, params)
    assert model.shape == (B, N_STEP, N_CLASS)
    assert trained_attn.shape == (B, N_STEP, N_STEP)
    # Exact softmax normalization now; only fp32 summation-order noise remains.
    assert jnp.allclose(model, ref_model, atol=1e-4, rtol=1e-4)
    assert jnp.allclose(trained_attn, ref_attn, atol=1e-4, rtol=1e-4)

    print("KERNEL_OK")
</pallas_src>

<mosaic_0001>
module attributes {stable_mosaic.version = 11 : i64} {
  func.func @attention_kernel(%arg0: i32, %arg1: memref<1x8x16xf32, #tpu.memory_space<vmem>>, %arg2: memref<1x8x16xf32, #tpu.memory_space<vmem>>, %arg3: memref<1x1x32xf32, #tpu.memory_space<vmem>>, %arg4: memref<24x64xf32, #tpu.memory_space<vmem>>, %arg5: memref<104x32xf32, #tpu.memory_space<vmem>>, %arg6: memref<72x16xf32, #tpu.memory_space<vmem>>, %arg7: memref<1x8x24xf32, #tpu.memory_space<vmem>>, %arg8: memref<8x32xf32, #tpu.memory_space<vmem>>, %arg9: memref<8x32xf32, #tpu.memory_space<vmem>>) attributes {dimension_semantics = [#tpu.dimension_semantics<parallel>], iteration_bounds = array<i64: 4>, scalar_prefetch = 0 : i64, scratch_operands = 2 : i64, tpu.core_type = #tpu.core_type<tc>, window_params = [{transform_indices = @transform_0, window_bounds = array<i64: 1, 8, 16>}, {transform_indices = @transform_1, window_bounds = array<i64: 1, 8, 16>}, {transform_indices = @transform_2, window_bounds = array<i64: 1, 1, 32>}, {pipeline_mode = #tpu.pipeline_mode<synchronous>, transform_indices = @transform_3, window_bounds = array<i64: 24, 64>}, {pipeline_mode = #tpu.pipeline_mode<synchronous>, transform_indices = @transform_4, window_bounds = array<i64: 104, 32>}, {pipeline_mode = #tpu.pipeline_mode<synchronous>, transform_indices = @transform_5, window_bounds = array<i64: 72, 16>}, {transform_indices = @transform_6, window_bounds = array<i64: 1, 8, 24>}]} {
    %c0 = arith.constant 0 : index
    %c0_0 = arith.constant 0 : index
    %c0_1 = arith.constant 0 : index
    %0 = vector.load %arg1[%c0, %c0_0, %c0_1] : memref<1x8x16xf32, #tpu.memory_space<vmem>>, vector<1x8x16xf32>
    %1 = vector.shape_cast %0 : vector<1x8x16xf32> to vector<8x16xf32>
    %c0_2 = arith.constant 0 : index
    %c0_3 = arith.constant 0 : index
    %c0_4 = arith.constant 0 : index
    %2 = vector.load %arg2[%c0_2, %c0_3, %c0_4] : memref<1x8x16xf32, #tpu.memory_space<vmem>>, vector<1x8x16xf32>
    %3 = vector.shape_cast %2 : vector<1x8x16xf32> to vector<8x16xf32>
    %c0_5 = arith.constant 0 : index
    %c0_6 = arith.constant 0 : index
    %c0_7 = arith.constant 0 : index
    %4 = vector.load %arg3[%c0_5, %c0_6, %c0_7] : memref<1x1x32xf32, #tpu.memory_space<vmem>>, vector<1x1x32xf32>
    %5 = vector.shape_cast %4 : vector<1x1x32xf32> to vector<1x32xf32>
    %c0_8 = arith.constant 0 : index
    %c0_9 = arith.constant 0 : index
    %6 = vector.load %arg4[%c0_8, %c0_9] : memref<24x64xf32, #tpu.memory_space<vmem>>, vector<16x64xf32>
    %c16 = arith.constant 16 : index
    %c0_10 = arith.constant 0 : index
    %7 = vector.load %arg4[%c16, %c0_10] : memref<24x64xf32, #tpu.memory_space<vmem>>, vector<1x64xf32>
    %c0_11 = arith.constant 0 : index
    %c0_12 = arith.constant 0 : index
    %8 = vector.load %arg5[%c0_11, %c0_12] : memref<104x32xf32, #tpu.memory_space<vmem>>, vector<32x32xf32>
    %c32 = arith.constant 32 : index
    %c0_13 = arith.constant 0 : index
    %9 = vector.load %arg5[%c32, %c0_13] : memref<104x32xf32, #tpu.memory_space<vmem>>, vector<32x32xf32>
    %c64 = arith.constant 64 : index
    %c0_14 = arith.constant 0 : index
    %10 = vector.load %arg5[%c64, %c0_14] : memref<104x32xf32, #tpu.memory_space<vmem>>, vector<32x32xf32>
    %c96 = arith.constant 96 : index
    %c0_15 = arith.constant 0 : index
    %11 = vector.load %arg5[%c96, %c0_15] : memref<104x32xf32, #tpu.memory_space<vmem>>, vector<1x32xf32>
    %c0_16 = arith.constant 0 : index
    %c0_17 = arith.constant 0 : index
    %12 = vector.load %arg6[%c0_16, %c0_17] : memref<72x16xf32, #tpu.memory_space<vmem>>, vector<64x16xf32>
    %c64_18 = arith.constant 64 : index
    %c0_19 = arith.constant 0 : index
    %13 = vector.load %arg6[%c64_18, %c0_19] : memref<72x16xf32, #tpu.memory_space<vmem>>, vector<1x16xf32>
    %14 = tpu.concatenate %1, %3 in 0 : vector<8x16xf32>, vector<8x16xf32> -> vector<16x16xf32>
    %cst = arith.constant dense<0.000000e+00> : vector<16x64xf32>
    %15 = tpu.matmul %14, %6, %cst {dimension_numbers = #tpu.dot_dimension_numbers<[1], [0], [0], [1], [0, 0, 1, 1], [], []>} : vector<16x16xf32>, vector<16x64xf32>, vector<16x64xf32> -> vector<16x64xf32>
    %16 = vector.broadcast %7 : vector<1x64xf32> to vector<16x64xf32>
    %17 = arith.addf %15, %16 : vector<16x64xf32>
    %18 = vector.extract_strided_slice %17 {offsets = [0, 0], sizes = [8, 32], strides = [1, 1]} : vector<16x64xf32> to vector<8x32xf32>
    %19 = vector.extract_strided_slice %17 {offsets = [8, 32], sizes = [8, 32], strides = [1, 1]} : vector<16x64xf32> to vector<8x32xf32>
    %20 = vector.extract_strided_slice %18 {offsets = [0, 0], sizes = [1, 32], strides = [1, 1]} : vector<8x32xf32> to vector<1x32xf32>
    %cst_20 = arith.constant dense<0.000000e+00> : vector<1x32xf32>
    %21 = tpu.matmul %5, %8, %cst_20 {dimension_numbers = #tpu.dot_dimension_numbers<[1], [0], [0], [1], [0, 0, 1, 1], [], []>} : vector<1x32xf32>, vector<32x32xf32>, vector<1x32xf32> -> vector<1x32xf32>
    %22 = arith.addf %20, %21 : vector<1x32xf32>
    %23 = math.tanh %22 : vector<1x32xf32>
    %c0_21 = arith.constant 0 : index
    %c0_22 = arith.constant 0 : index
    %24 = vector.load %arg8[%c0_21, %c0_22] : memref<8x32xf32, #tpu.memory_space<vmem>>, vector<1x32xf32>
    tpu.vector_store %arg8[%c0_21, %c0_22], %23 {strides = array<i32>} : memref<8x32xf32, #tpu.memory_space<vmem>>, vector<1x32xf32>,
    %25 = vector.extract_strided_slice %18 {offsets = [1, 0], sizes = [1, 32], strides = [1, 1]} : vector<8x32xf32> to vector<1x32xf32>
    %cst_23 = arith.constant dense<0.000000e+00> : vector<1x32xf32>
    %26 = tpu.matmul %23, %8, %cst_23 {dimension_numbers = #tpu.dot_dimension_numbers<[1], [0], [0], [1], [0, 0, 1, 1], [], []>} : vector<1x32xf32>, vector<32x32xf32>, vector<1x32xf32> -> vector<1x32xf32>
    %27 = arith.addf %25, %26 : vector<1x32xf32>
    %28 = math.tanh %27 : vector<1x32xf32>
    %c1 = arith.constant 1 : index
    %c0_24 = arith.constant 0 : index
    %29 = vector.load %arg8[%c1, %c0_24] : memref<8x32xf32, #tpu.memory_space<vmem>>, vector<1x32xf32>
    tpu.vector_store %arg8[%c1, %c0_24], %28 {strides = array<i32>} : memref<8x32xf32, #tpu.memory_space<vmem>>, vector<1x32xf32>,
    %30 = vector.extract_strided_slice %18 {offsets = [2, 0], sizes = [1, 32], strides = [1, 1]} : vector<8x32xf32> to vector<1x32xf32>
    %cst_25 = arith.constant dense<0.000000e+00> : vector<1x32xf32>
    %31 = tpu.matmul %28, %8, %cst_25 {dimension_numbers = #tpu.dot_dimension_numbers<[1], [0], [0], [1], [0, 0, 1, 1], [], []>} : vector<1x32xf32>, vector<32x32xf32>, vector<1x32xf32> -> vector<1x32xf32>
    %32 = arith.addf %30, %31 : vector<1x32xf32>
    %33 = math.tanh %32 : vector<1x32xf32>
    %c2 = arith.constant 2 : index
    %c0_26 = arith.constant 0 : index
    %34 = vector.load %arg8[%c2, %c0_26] : memref<8x32xf32, #tpu.memory_space<vmem>>, vector<1x32xf32>
    tpu.vector_store %arg8[%c2, %c0_26], %33 {strides = array<i32>} : memref<8x32xf32, #tpu.memory_space<vmem>>, vector<1x32xf32>,
    %35 = vector.extract_strided_slice %18 {offsets = [3, 0], sizes = [1, 32], strides = [1, 1]} : vector<8x32xf32> to vector<1x32xf32>
    %cst_27 = arith.constant dense<0.000000e+00> : vector<1x32xf32>
    %36 = tpu.matmul %33, %8, %cst_27 {dimension_numbers = #tpu.dot_dimension_numbers<[1], [0], [0], [1], [0, 0, 1, 1], [], []>} : vector<1x32xf32>, vector<32x32xf32>, vector<1x32xf32> -> vector<1x32xf32>
    %37 = arith.addf %35, %36 : vector<1x32xf32>
    %38 = math.tanh %37 : vector<1x32xf32>
    %c3 = arith.constant 3 : index
    %c0_28 = arith.constant 0 : index
    %39 = vector.load %arg8[%c3, %c0_28] : memref<8x32xf32, #tpu.memory_space<vmem>>, vector<1x32xf32>
    tpu.vector_store %arg8[%c3, %c0_28], %38 {strides = array<i32>} : memref<8x32xf32, #tpu.memory_space<vmem>>, vector<1x32xf32>,
    %40 = vector.extract_strided_slice %18 {offsets = [4, 0], sizes = [1, 32], strides = [1, 1]} : vector<8x32xf32> to vector<1x32xf32>
    %cst_29 = arith.constant dense<0.000000e+00> : vector<1x32xf32>
    %41 = tpu.matmul %38, %8, %cst_29 {dimension_numbers = #tpu.dot_dimension_numbers<[1], [0], [0], [1], [0, 0, 1, 1], [], []>} : vector<1x32xf32>, vector<32x32xf32>, vector<1x32xf32> -> vector<1x32xf32>
    %42 = arith.addf %40, %41 : vector<1x32xf32>
    %43 = math.tanh %42 : vector<1x32xf32>
    %c4 = arith.constant 4 : index
    %c0_30 = arith.constant 0 : index
    %44 = vector.load %arg8[%c4, %c0_30] : memref<8x32xf32, #tpu.memory_space<vmem>>, vector<1x32xf32>
    tpu.vector_store %arg8[%c4, %c0_30], %43 {strides = array<i32>} : memref<8x32xf32, #tpu.memory_space<vmem>>, vector<1x32xf32>,
    %45 = vector.extract_strided_slice %18 {offsets = [5, 0], sizes = [1, 32], strides = [1, 1]} : vector<8x32xf32> to vector<1x32xf32>
    %cst_31 = arith.constant dense<0.000000e+00> : vector<1x32xf32>
    %46 = tpu.matmul %43, %8, %cst_31 {dimension_numbers = #tpu.dot_dimension_numbers<[1], [0], [0], [1], [0, 0, 1, 1], [], []>} : vector<1x32xf32>, vector<32x32xf32>, vector<1x32xf32> -> vector<1x32xf32>
    %47 = arith.addf %45, %46 : vector<1x32xf32>
    %48 = math.tanh %47 : vector<1x32xf32>
    %c5 = arith.constant 5 : index
    %c0_32 = arith.constant 0 : index
    %49 = vector.load %arg8[%c5, %c0_32] : memref<8x32xf32, #tpu.memory_space<vmem>>, vector<1x32xf32>
    tpu.vector_store %arg8[%c5, %c0_32], %48 {strides = array<i32>} : memref<8x32xf32, #tpu.memory_space<vmem>>, vector<1x32xf32>,
    %50 = vector.extract_strided_slice %18 {offsets = [6, 0], sizes = [1, 32], strides = [1, 1]} : vector<8x32xf32> to vector<1x32xf32>
    %cst_33 = arith.constant dense<0.000000e+00> : vector<1x32xf32>
    %51 = tpu.matmul %48, %8, %cst_33 {dimension_numbers = #tpu.dot_dimension_numbers<[1], [0], [0], [1], [0, 0, 1, 1], [], []>} : vector<1x32xf32>, vector<32x32xf32>, vector<1x32xf32> -> vector<1x32xf32>
    %52 = arith.addf %50, %51 : vector<1x32xf32>
    %53 = math.tanh %52 : vector<1x32xf32>
    %c6 = arith.constant 6 : index
    %c0_34 = arith.constant 0 : index
    %54 = vector.load %arg8[%c6, %c0_34] : memref<8x32xf32, #tpu.memory_space<vmem>>, vector<1x32xf32>
    tpu.vector_store %arg8[%c6, %c0_34], %53 {strides = array<i32>} : memref<8x32xf32, #tpu.memory_space<vmem>>, vector<1x32xf32>,
    %55 = vector.extract_strided_slice %18 {offsets = [7, 0], sizes = [1, 32], strides = [1, 1]} : vector<8x32xf32> to vector<1x32xf32>
    %cst_35 = arith.constant dense<0.000000e+00> : vector<1x32xf32>
    %56 = tpu.matmul %53, %8, %cst_35 {dimension_numbers = #tpu.dot_dimension_numbers<[1], [0], [0], [1], [0, 0, 1, 1], [], []>} : vector<1x32xf32>, vector<32x32xf32>, vector<1x32xf32> -> vector<1x32xf32>
    %57 = arith.addf %55, %56 : vector<1x32xf32>
    %58 = math.tanh %57 : vector<1x32xf32>
    %c7 = arith.constant 7 : index
    %c0_36 = arith.constant 0 : index
    %59 = vector.load %arg8[%c7, %c0_36] : memref<8x32xf32, #tpu.memory_space<vmem>>, vector<1x32xf32>
    tpu.vector_store %arg8[%c7, %c0_36], %58 {strides = array<i32>} : memref<8x32xf32, #tpu.memory_space<vmem>>, vector<1x32xf32>,
    %60 = vector.extract_strided_slice %19 {offsets = [0, 0], sizes = [1, 32], strides = [1, 1]} : vector<8x32xf32> to vector<1x32xf32>
    %cst_37 = arith.constant dense<0.000000e+00> : vector<1x32xf32>
    %61 = tpu.matmul %58, %9, %cst_37 {dimension_numbers = #tpu.dot_dimension_numbers<[1], [0], [0], [1], [0, 0, 1, 1], [], []>} : vector<1x32xf32>, vector<32x32xf32>, vector<1x32xf32> -> vector<1x32xf32>
    %62 = arith.addf %60, %61 : vector<1x32xf32>
    %63 = math.tanh %62 : vector<1x32xf32>
    %c0_38 = arith.constant 0 : index
    %c0_39 = arith.constant 0 : index
    %64 = vector.load %arg9[%c0_38, %c0_39] : memref<8x32xf32, #tpu.memory_space<vmem>>, vector<1x32xf32>
    tpu.vector_store %arg9[%c0_38, %c0_39], %63 {strides = array<i32>} : memref<8x32xf32, #tpu.memory_space<vmem>>, vector<1x32xf32>,
    %65 = vector.extract_strided_slice %19 {offsets = [1, 0], sizes = [1, 32], strides = [1, 1]} : vector<8x32xf32> to vector<1x32xf32>
    %cst_40 = arith.constant dense<0.000000e+00> : vector<1x32xf32>
    %66 = tpu.matmul %63, %9, %cst_40 {dimension_numbers = #tpu.dot_dimension_numbers<[1], [0], [0], [1], [0, 0, 1, 1], [], []>} : vector<1x32xf32>, vector<32x32xf32>, vector<1x32xf32> -> vector<1x32xf32>
    %67 = arith.addf %65, %66 : vector<1x32xf32>
    %68 = math.tanh %67 : vector<1x32xf32>
    %c1_41 = arith.constant 1 : index
    %c0_42 = arith.constant 0 : index
    %69 = vector.load %arg9[%c1_41, %c0_42] : memref<8x32xf32, #tpu.memory_space<vmem>>, vector<1x32xf32>
    tpu.vector_store %arg9[%c1_41, %c0_42], %68 {strides = array<i32>} : memref<8x32xf32, #tpu.memory_space<vmem>>, vector<1x32xf32>,
    %70 = vector.extract_strided_slice %19 {offsets = [2, 0], sizes = [1, 32], strides = [1, 1]} : vector<8x32xf32> to vector<1x32xf32>
    %cst_43 = arith.constant dense<0.000000e+00> : vector<1x32xf32>
    %71 = tpu.matmul %68, %9, %cst_43 {dimension_numbers = #tpu.dot_dimension_numbers<[1], [0], [0], [1], [0, 0, 1, 1], [], []>} : vector<1x32xf32>, vector<32x32xf32>, vector<1x32xf32> -> vector<1x32xf32>
    %72 = arith.addf %70, %71 : vector<1x32xf32>
    %73 = math.tanh %72 : vector<1x32xf32>
    %c2_44 = arith.constant 2 : index
    %c0_45 = arith.constant 0 : index
    %74 = vector.load %arg9[%c2_44, %c0_45] : memref<8x32xf32, #tpu.memory_space<vmem>>, vector<1x32xf32>
    tpu.vector_store %arg9[%c2_44, %c0_45], %73 {strides = array<i32>} : memref<8x32xf32, #tpu.memory_space<vmem>>, vector<1x32xf32>,
    %75 = vector.extract_strided_slice %19 {offsets = [3, 0], sizes = [1, 32], strides = [1, 1]} : vector<8x32xf32> to vector<1x32xf32>
    %cst_46 = arith.constant dense<0.000000e+00> : vector<1x32xf32>
    %76 = tpu.matmul %73, %9, %cst_46 {dimension_numbers = #tpu.dot_dimension_numbers<[1], [0], [0], [1], [0, 0, 1, 1], [], []>} : vector<1x32xf32>, vector<32x32xf32>, vector<1x32xf32> -> vector<1x32xf32>
    %77 = arith.addf %75, %76 : vector<1x32xf32>
    %78 = math.tanh %77 : vector<1x32xf32>
    %c3_47 = arith.constant 3 : index
    %c0_48 = arith.constant 0 : index
    %79 = vector.load %arg9[%c3_47, %c0_48] : memref<8x32xf32, #tpu.memory_space<vmem>>, vector<1x32xf32>
    tpu.vector_store %arg9[%c3_47, %c0_48], %78 {strides = array<i32>} : memref<8x32xf32, #tpu.memory_space<vmem>>, vector<1x32xf32>,
    %80 = vector.extract_strided_slice %19 {offsets = [4, 0], sizes = [1, 32], strides = [1, 1]} : vector<8x32xf32> to vector<1x32xf32>
    %cst_49 = arith.constant dense<0.000000e+00> : vector<1x32xf32>
    %81 = tpu.matmul %78, %9, %cst_49 {dimension_numbers = #tpu.dot_dimension_numbers<[1], [0], [0], [1], [0, 0, 1, 1], [], []>} : vector<1x32xf32>, vector<32x32xf32>, vector<1x32xf32> -> vector<1x32xf32>
    %82 = arith.addf %80, %81 : vector<1x32xf32>
    %83 = math.tanh %82 : vector<1x32xf32>
    %c4_50 = arith.constant 4 : index
    %c0_51 = arith.constant 0 : index
    %84 = vector.load %arg9[%c4_50, %c0_51] : memref<8x32xf32, #tpu.memory_space<vmem>>, vector<1x32xf32>
    tpu.vector_store %arg9[%c4_50, %c0_51], %83 {strides = array<i32>} : memref<8x32xf32, #tpu.memory_space<vmem>>, vector<1x32xf32>,
    %85 = vector.extract_strided_slice %19 {offsets = [5, 0], sizes = [1, 32], strides = [1, 1]} : vector<8x32xf32> to vector<1x32xf32>
    %cst_52 = arith.constant dense<0.000000e+00> : vector<1x32xf32>
    %86 = tpu.matmul %83, %9, %cst_52 {dimension_numbers = #tpu.dot_dimension_numbers<[1], [0], [0], [1], [0, 0, 1, 1], [], []>} : vector<1x32xf32>, vector<32x32xf32>, vector<1x32xf32> -> vector<1x32xf32>
    %87 = arith.addf %85, %86 : vector<1x32xf32>
    %88 = math.tanh %87 : vector<1x32xf32>
    %c5_53 = arith.constant 5 : index
    %c0_54 = arith.constant 0 : index
    %89 = vector.load %arg9[%c5_53, %c0_54] : memref<8x32xf32, #tpu.memory_space<vmem>>, vector<1x32xf32>
    tpu.vector_store %arg9[%c5_53, %c0_54], %88 {strides = array<i32>} : memref<8x32xf32, #tpu.memory_space<vmem>>, vector<1x32xf32>,
    %90 = vector.extract_strided_slice %19 {offsets = [6, 0], sizes = [1, 32], strides = [1, 1]} : vector<8x32xf32> to vector<1x32xf32>
    %cst_55 = arith.constant dense<0.000000e+00> : vector<1x32xf32>
    %91 = tpu.matmul %88, %9, %cst_55 {dimension_numbers = #tpu.dot_dimension_numbers<[1], [0], [0], [1], [0, 0, 1, 1], [], []>} : vector<1x32xf32>, vector<32x32xf32>, vector<1x32xf32> -> vector<1x32xf32>
    %92 = arith.addf %90, %91 : vector<1x32xf32>
    %93 = math.tanh %92 : vector<1x32xf32>
    %c6_56 = arith.constant 6 : index
    %c0_57 = arith.constant 0 : index
    %94 = vector.load %arg9[%c6_56, %c0_57] : memref<8x32xf32, #tpu.memory_space<vmem>>, vector<1x32xf32>
    tpu.vector_store %arg9[%c6_56, %c0_57], %93 {strides = array<i32>} : memref<8x32xf32, #tpu.memory_space<vmem>>, vector<1x32xf32>,
    %95 = vector.extract_strided_slice %19 {offsets = [7, 0], sizes = [1, 32], strides = [1, 1]} : vector<8x32xf32> to vector<1x32xf32>
    %cst_58 = arith.constant dense<0.000000e+00> : vector<1x32xf32>
    %96 = tpu.matmul %93, %9, %cst_58 {dimension_numbers = #tpu.dot_dimension_numbers<[1], [0], [0], [1], [0, 0, 1, 1], [], []>} : vector<1x32xf32>, vector<32x32xf32>, vector<1x32xf32> -> vector<1x32xf32>
    %97 = arith.addf %95, %96 : vector<1x32xf32>
    %98 = math.tanh %97 : vector<1x32xf32>
    %c7_59 = arith.constant 7 : index
    %c0_60 = arith.constant 0 : index
    %99 = vector.load %arg9[%c7_59, %c0_60] : memref<8x32xf32, #tpu.memory_space<vmem>>, vector<1x32xf32>
    tpu.vector_store %arg9[%c7_59, %c0_60], %98 {strides = array<i32>} : memref<8x32xf32, #tpu.memory_space<vmem>>, vector<1x32xf32>,
    %c0_61 = arith.constant 0 : index
    %c0_62 = arith.constant 0 : index
    %100 = vector.load %arg8[%c0_61, %c0_62] : memref<8x32xf32, #tpu.memory_space<vmem>>, vector<8x32xf32>
    %c0_63 = arith.constant 0 : index
    %c0_64 = arith.constant 0 : index
    %101 = vector.load %arg9[%c0_63, %c0_64] : memref<8x32xf32, #tpu.memory_space<vmem>>, vector<8x32xf32>
    %cst_65 = arith.constant dense<0.000000e+00> : vector<8x32xf32>
    %102 = tpu.matmul %100, %10, %cst_65 {dimension_numbers = #tpu.dot_dimension_numbers<[1], [0], [0], [1], [0, 0, 1, 1], [], []>} : vector<8x32xf32>, vector<32x32xf32>, vector<8x32xf32> -> vector<8x32xf32>
    %103 = vector.broadcast %11 : vector<1x32xf32> to vector<8x32xf32>
    %104 = arith.addf %102, %103 : vector<8x32xf32>
    %cst_66 = arith.constant dense<0.000000e+00> : vector<8x8xf32>
    %105 = tpu.matmul %101, %104, %cst_66 {dimension_numbers = #tpu.dot_dimension_numbers<[1], [1], [0], [0], [0, 0, 1, 0], [], []>} : vector<8x32xf32>, vector<8x32xf32>, vector<8x8xf32> -> vector<8x8xf32>
    %cst_67 = arith.constant dense<0xFF800000> : vector<8xf32>
    %106 = vector.multi_reduction <maximumf>, %105, %cst_67 [1] : vector<8x8xf32> to vector<8xf32>
    %107 = vector.shape_cast %106 : vector<8xf32> to vector<8x1xf32>
    %108 = vector.broadcast %107 : vector<8x1xf32> to vector<8x8xf32>
    %109 = arith.subf %105, %108 : vector<8x8xf32>
    %110 = math.exp %109 : vector<8x8xf32>
    %cst_68 = arith.constant dense<0.000000e+00> : vector<8xf32>
    %111 = vector.multi_reduction <add>, %110, %cst_68 [1] : vector<8x8xf32> to vector<8xf32>
    %112 = vector.shape_cast %111 : vector<8xf32> to vector<8x1xf32>
    %113 = vector.broadcast %112 : vector<8x1xf32> to vector<8x8xf32>
    %114 = arith.divf %110, %113 : vector<8x8xf32>
    %cst_69 = arith.constant dense<0.000000e+00> : vector<8x32xf32>
    %115 = tpu.matmul %114, %100, %cst_69 {dimension_numbers = #tpu.dot_dimension_numbers<[1], [0], [0], [1], [0, 0, 1, 1], [], []>} : vector<8x8xf32>, vector<8x32xf32>, vector<8x32xf32> -> vector<8x32xf32>
    %116 = tpu.concatenate %101, %115 in 1 : vector<8x32xf32>, vector<8x32xf32> -> vector<8x64xf32>
    %cst_70 = arith.constant dense<0.000000e+00> : vector<8x16xf32>
    %117 = tpu.matmul %116, %12, %cst_70 {dimension_numbers = #tpu.dot_dimension_numbers<[1], [0], [0], [1], [0, 0, 1, 1], [], []>} : vector<8x64xf32>, vector<64x16xf32>, vector<8x16xf32> -> vector<8x16xf32>
    %118 = vector.broadcast %13 : vector<1x16xf32> to vector<8x16xf32>
    %119 = arith.addf %117, %118 : vector<8x16xf32>
    %120 = tpu.concatenate %119, %114 in 1 : vector<8x16xf32>, vector<8x8xf32> -> vector<8x24xf32>
    %c0_71 = arith.constant 0 : index
    %c0_72 = arith.constant 0 : index
    %c0_73 = arith.constant 0 : index
    %121 = vector.load %arg7[%c0_71, %c0_72, %c0_73] : memref<1x8x24xf32, #tpu.memory_space<vmem>>, vector<1x8x24xf32>
    %122 = vector.shape_cast %121 : vector<1x8x24xf32> to vector<8x24xf32>
    %123 = vector.shape_cast %120 : vector<8x24xf32> to vector<1x8x24xf32>
    tpu.vector_store %arg7[%c0_71, %c0_72, %c0_73], %123 {strides = array<i32>} : memref<1x8x24xf32, #tpu.memory_space<vmem>>, vector<1x8x24xf32>,
    return
  }
  func.func @transform_0(%arg0: i32) -> (i32, i32, i32) {
    %c0_i32 = arith.constant 0 : i32
    %c0_i32_0 = arith.constant 0 : i32
    %c0_i32_1 = arith.constant 0 : i32
    return %arg0, %c0_i32, %c0_i32_0 : i32, i32, i32
  }
  func.func @transform_1(%arg0: i32) -> (i32, i32, i32) {
    %c0_i32 = arith.constant 0 : i32
    %c0_i32_0 = arith.constant 0 : i32
    %c0_i32_1 = arith.constant 0 : i32
    return %arg0, %c0_i32, %c0_i32_0 : i32, i32, i32
  }
  func.func @transform_2(%arg0: i32) -> (i32, i32, i32) {
    %c0_i32 = arith.constant 0 : i32
    %c0_i32_0 = arith.constant 0 : i32
    %c0_i32_1 = arith.constant 0 : i32
    return %arg0, %c0_i32, %c0_i32_0 : i32, i32, i32
  }
  func.func @transform_3(%arg0: i32) -> (i32, i32) {
    %c0_i32 = arith.constant 0 : i32
    %c0_i32_0 = arith.constant 0 : i32
    %c0_i32_1 = arith.constant 0 : i32
    return %c0_i32, %c0_i32_0 : i32, i32
  }
  func.func @transform_4(%arg0: i32) -> (i32, i32) {
    %c0_i32 = arith.constant 0 : i32
    %c0_i32_0 = arith.constant 0 : i32
    %c0_i32_1 = arith.constant 0 : i32
    return %c0_i32, %c0_i32_0 : i32, i32
  }
  func.func @transform_5(%arg0: i32) -> (i32, i32) {
    %c0_i32 = arith.constant 0 : i32
    %c0_i32_0 = arith.constant 0 : i32
    %c0_i32_1 = arith.constant 0 : i32
    return %c0_i32, %c0_i32_0 : i32, i32
  }
  func.func @transform_6(%arg0: i32) -> (i32, i32, i32) {
    %c0_i32 = arith.constant 0 : i32
    %c0_i32_0 = arith.constant 0 : i32
    %c0_i32_1 = arith.constant 0 : i32
    return %arg0, %c0_i32, %c0_i32_0 : i32, i32, i32
  }
}

</mosaic_0001>

<llo_original>
// kernel: attention_forward.1
$region0: #{attention_forward.1}
  #allocation0 [shape = 'u32[]', space=smem, size = 0x4, offset = 0x4, fixed_abs, tag = 'smem constant byte address 0x4 - core index']
  #allocation1 [shape = 'u32[72,128]{1,0:T(1,128)}', space=vmem, size = 0x9000, scoped, tag = 'internal scratch']
  #allocation2 [shape = 'f32[8,32]{1,0:T(8,128)}', space=vmem, size = 0x1000, scoped, tag = 'scratch operand']
  #allocation3 [shape = 'f32[8,32]{1,0:T(8,128)}', space=vmem, size = 0x1000, scoped, tag = 'scratch operand']
  %s0 = inlined_call_operand.vmem [shape: f32[4,8,16], index: 0, kind: input, shape index: {}]
  %s1 = inlined_call_operand.vmem [shape: f32[4,8,16], index: 1, kind: input, shape index: {}]
  %s2 = inlined_call_operand.vmem [shape: f32[4,1,32], index: 2, kind: input, shape index: {}]
  %s3 = inlined_call_operand.vmem [shape: f32[24,64], index: 3, kind: input, shape index: {}]
  %s4 = inlined_call_operand.vmem [shape: f32[104,32], index: 4, kind: input, shape index: {}]
  %s5 = inlined_call_operand.vmem [shape: f32[72,16], index: 5, kind: input, shape index: {}]
  %s6 = inlined_call_operand.vmem [shape: f32[4,8,24], index: 6, kind: output, shape index: {}]
  %s7 = sld [smem:[#allocation0]]
  $region57: #{attention_forward.1} parent=0
    _
  %s9 = ssub.s32 1, %s7
  %s10 = scalar_select 0, %s9, %s7
  loop: start=0, step=1, limit=6
  $region2: #{attention_forward.1} parent=0 // loop_pre_header
    _
  $region3: #{attention_forward.1} parent=0 // loop_header
    %s12 = sphi 0, %s16
    %p13 = scmp.ge.s32.totalorder %s12, 6
    %s22 = sphi 0, %s24
    %s25 = sphi 0, %s22
    %s26 = sphi 0, %s25
    %s42 = sphi 0, %s26
    %s48 = sphi 0, %s50
    %s51 = sphi 0, %s48
    %s52 = sphi 0, %s51
    %s68 = sphi 0, %s52
    %s74 = sphi 0, %s76
    %s77 = sphi 0, %s74
    %s78 = sphi 0, %s77
    %s94 = sphi 0, %s78
    %s98 = sphi 0, %s98
    %s100 = sphi 0, %s98
    %s101 = sphi 0, %s100
    %s115 = sphi 0, %s101
    %s119 = sphi 0, %s119
    %s121 = sphi 0, %s119
    %s122 = sphi 0, %s121
    %s136 = sphi 0, %s122
    %s140 = sphi 0, %s140
    %s142 = sphi 0, %s140
    %s143 = sphi 0, %s142
    %s157 = sphi 0, %s143
    %s163 = sphi 0, %s165
    %s166 = sphi 0, %s163
    %s167 = sphi 0, %s166
    %s183 = sphi 0, %s167
  $region4: #{attention_forward.1} parent=0 // loop_header_branch
    %15 = sbr.rel (%p13) target = $region8
  $region5: #{attention_forward.1} parent=0 // loop_body
    %s17 = ssub.s32 %s12, 1
    %s18 = ssub.s32 %s12, 2
    %s19 = sadd.s32 %s12, 1
    %s20 = ssub.s32 %s12, %s19
    %p21 = scmp.eq.s32.totalorder %s20, 0
    %s23 = sadd.s32 %s22, 1
    %s24 = scalar_select %p21, %s22, %s23
    %p27 = pneg %p21
    %p28 = scmp.eq.s32.totalorder %s12, 3
    %p29 = por %p27, %p28
    %p30 = scmp.ne.s32.totalorder %s22, %s25
    %p31 = scmp.eq.s32.totalorder %s12, 0
    %p32 = por %p30, %p31
    %p33 = scmp.ne.s32.totalorder %s22, %s25
    %p34 = scmp.eq.s32.totalorder %s17, 3
    %p35 = por %p33, %p34
    %p36 = scmp.ne.s32.totalorder %s25, %s26
    %p37 = scmp.eq.s32.totalorder %s17, 0
    %p38 = por %p36, %p37
    %p39 = scmp.ne.s32.totalorder %s25, %s26
    %p40 = scmp.eq.s32.totalorder %s18, 3
    %p41 = por %p39, %p40
    %p43 = scmp.ne.s32.totalorder %s26, %s42
    %p44 = scmp.eq.s32.totalorder %s18, 0
    %p45 = por %p43, %p44
    %s46 = ssub.s32 %s12, %s19
    %p47 = scmp.eq.s32.totalorder %s46, 0
    %s49 = sadd.s32 %s48, 1
    %s50 = scalar_select %p47, %s48, %s49
    %p53 = pneg %p47
    %p54 = scmp.eq.s32.totalorder %s12, 3
    %p55 = por %p53, %p54
    %p56 = scmp.ne.s32.totalorder %s48, %s51
    %p57 = scmp.eq.s32.totalorder %s12, 0
    %p58 = por %p56, %p57
    %p59 = scmp.ne.s32.totalorder %s48, %s51
    %p60 = scmp.eq.s32.totalorder %s17, 3
    %p61 = por %p59, %p60
    %p62 = scmp.ne.s32.totalorder %s51, %s52
    %p63 = scmp.eq.s32.totalorder %s17, 0
    %p64 = por %p62, %p63
    %p65 = scmp.ne.s32.totalorder %s51, %s52
    %p66 = scmp.eq.s32.totalorder %s18, 3
    %p67 = por %p65, %p66
    %p69 = scmp.ne.s32.totalorder %s52, %s68
    %p70 = scmp.eq.s32.totalorder %s18, 0
    %p71 = por %p69, %p70
    %s72 = ssub.s32 %s12, %s19
    %p73 = scmp.eq.s32.totalorder %s72, 0
    %s75 = sadd.s32 %s74, 1
    %s76 = scalar_select %p73, %s74, %s75
    %p79 = pneg %p73
    %p80 = scmp.eq.s32.totalorder %s12, 3
    %p81 = por %p79, %p80
    %p82 = scmp.ne.s32.totalorder %s74, %s77
    %p83 = scmp.eq.s32.totalorder %s12, 0
    %p84 = por %p82, %p83
    %p85 = scmp.ne.s32.totalorder %s74, %s77
    %p86 = scmp.eq.s32.totalorder %s17, 3
    %p87 = por %p85, %p86
    %p88 = scmp.ne.s32.totalorder %s77, %s78
    %p89 = scmp.eq.s32.totalorder %s17, 0
    %p90 = por %p88, %p89
    %p91 = scmp.ne.s32.totalorder %s77, %s78
    %p92 = scmp.eq.s32.totalorder %s18, 3
    %p93 = por %p91, %p92
    %p95 = scmp.ne.s32.totalorder %s78, %s94
    %p96 = scmp.eq.s32.totalorder %s18, 0
    %p97 = por %p95, %p96
    %s99 = sadd.s32 %s98, 1
    %p102 = scmp.eq.s32.totalorder %s12, 3
    %p103 = scmp.ne.s32.totalorder %s98, %s100
    %p104 = scmp.eq.s32.totalorder %s12, 0
    %p105 = por %p103, %p104
    %p106 = scmp.ne.s32.totalorder %s98, %s100
    %p107 = scmp.eq.s32.totalorder %s17, 3
    %p108 = por %p106, %p107
    %p109 = scmp.ne.s32.totalorder %s100, %s101
    %p110 = scmp.eq.s32.totalorder %s17, 0
    %p111 = por %p109, %p110
    %p112 = scmp.ne.s32.totalorder %s100, %s101
    %p113 = scmp.eq.s32.totalorder %s18, 3
    %p114 = por %p112, %p113
    %p116 = scmp.ne.s32.totalorder %s101, %s115
    %p117 = scmp.eq.s32.totalorder %s18, 0
    %p118 = por %p116, %p117
    %s120 = sadd.s32 %s119, 1
    %p123 = scmp.eq.s32.totalorder %s12, 3
    %p124 = scmp.ne.s32.totalorder %s119, %s121
    %p125 = scmp.eq.s32.totalorder %s12, 0
    %p126 = por %p124, %p125
    %p127 = scmp.ne.s32.totalorder %s119, %s121
    %p128 = scmp.eq.s32.totalorder %s17, 3
    %p129 = por %p127, %p128
    %p130 = scmp.ne.s32.totalorder %s121, %s122
    %p131 = scmp.eq.s32.totalorder %s17, 0
    %p132 = por %p130, %p131
    %p133 = scmp.ne.s32.totalorder %s121, %s122
    %p134 = scmp.eq.s32.totalorder %s18, 3
    %p135 = por %p133, %p134
    %p137 = scmp.ne.s32.totalorder %s122, %s136
    %p138 = scmp.eq.s32.totalorder %s18, 0
    %p139 = por %p137, %p138
    %s141 = sadd.s32 %s140, 1
    %p144 = scmp.eq.s32.totalorder %s12, 3
    %p145 = scmp.ne.s32.totalorder %s140, %s142
    %p146 = scmp.eq.s32.totalorder %s12, 0
    %p147 = por %p145, %p146
    %p148 = scmp.ne.s32.totalorder %s140, %s142
    %p149 = scmp.eq.s32.totalorder %s17, 3
    %p150 = por %p148, %p149
    %p151 = scmp.ne.s32.totalorder %s142, %s143
    %p152 = scmp.eq.s32.totalorder %s17, 0
    %p153 = por %p151, %p152
    %p154 = scmp.ne.s32.totalorder %s142, %s143
    %p155 = scmp.eq.s32.totalorder %s18, 3
    %p156 = por %p154, %p155
    %p158 = scmp.ne.s32.totalorder %s143, %s157
    %p159 = scmp.eq.s32.totalorder %s18, 0
    %p160 = por %p158, %p159
    %s161 = ssub.s32 %s12, %s19
    %p162 = scmp.eq.s32.totalorder %s161, 0
    %s164 = sadd.s32 %s163, 1
    %s165 = scalar_select %p162, %s163, %s164
    %p168 = pneg %p162
    %p169 = scmp.eq.s32.totalorder %s12, 3
    %p170 = por %p168, %p169
    %p171 = scmp.ne.s32.totalorder %s163, %s166
    %p172 = scmp.eq.s32.totalorder %s12, 0
    %p173 = por %p171, %p172
    %p174 = scmp.ne.s32.totalorder %s163, %s166
    %p175 = scmp.eq.s32.totalorder %s17, 3
    %p176 = por %p174, %p175
    %p177 = scmp.ne.s32.totalorder %s166, %s167
    %p178 = scmp.eq.s32.totalorder %s17, 0
    %p179 = por %p177, %p178
    %p180 = scmp.ne.s32.totalorder %s166, %s167
    %p181 = scmp.eq.s32.totalorder %s18, 3
    %p182 = por %p180, %p181
    %p184 = scmp.ne.s32.totalorder %s167, %s183
    %p185 = scmp.eq.s32.totalorder %s18, 0
    %p186 = por %p184, %p185
    %p187 = scmp.le.s32.totalorder 1, %s12
    %p188 = scmp.lt.s32.totalorder %s12, 5
    %p189 = pnand %p187, %p188
    %p190 = pneg %p189
    // Predicated region
    $region9: #{attention_forward.1} parent=5 // pred_check
      _
    $region10: #{attention_forward.1} parent=5 // pred_check_branch
      %192 = sbr.rel (%p189) target = $region12
    $region11: #{attention_forward.1} parent=5 // pred_region
      %s193 = ssub.s32 %s12, 1
      // Predicated region
      $region13: #{attention_forward.1} parent=11 // pred_check
        %p194 = pneg %p111
      $region14: #{attention_forward.1} parent=11 // pred_check_branch
        %196 = sbr.rel (%p194) target = $region16
      $region15: #{attention_forward.1} parent=11 // pred_region
        _
      $region16: #{attention_forward.1} parent=11 // pred_fallthru
        _
      // Predicated region
      $region17: #{attention_forward.1} parent=11 // pred_check
        %p197 = pneg %p132
      $region18: #{attention_forward.1} parent=11 // pred_check_branch
        %199 = sbr.rel (%p197) target = $region20
      $region19: #{attention_forward.1} parent=11 // pred_region
        _
      $region20: #{attention_forward.1} parent=11 // pred_fallthru
        _
      // Predicated region
      $region21: #{attention_forward.1} parent=11 // pred_check
        %p200 = pneg %p153
      $region22: #{attention_forward.1} parent=11 // pred_check_branch
        %202 = sbr.rel (%p200) target = $region24
      $region23: #{attention_forward.1} parent=11 // pred_region
        _
      $region24: #{attention_forward.1} parent=11 // pred_fallthru
        _
    $region12: #{attention_forward.1} parent=5 // pred_fallthru
      _
    %p203 = scmp.lt.s32.totalorder %s12, 4
    // Predicated region
    $region25: #{attention_forward.1} parent=5 // pred_check
      %p204 = pneg %p203
    $region26: #{attention_forward.1} parent=5 // pred_check_branch
      %206 = sbr.rel (%p204) target = $region28
    $region27: #{attention_forward.1} parent=5 // pred_region
      // Predicated region
      $region29: #{attention_forward.1} parent=27 // pred_check
        %p207 = pneg %p32
      $region30: #{attention_forward.1} parent=27 // pred_check_branch
        %209 = sbr.rel (%p207) target = $region32
      $region31: #{attention_forward.1} parent=27 // pred_region
        %p210 = scmp.lt.s32.totalorder %s12, 3
        %s211 = scalar_select %p210, %s12, 3
        %s212 = smul.addr %s211, 8
        %s213 = scalar_lea.vmem %s0, %s212
      $region32: #{attention_forward.1} parent=27 // pred_fallthru
        _
      // Predicated region
      $region33: #{attention_forward.1} parent=27 // pred_check
        %p214 = pneg %p58
      $region34: #{attention_forward.1} parent=27 // pred_check_branch
        %216 = sbr.rel (%p214) target = $region36
      $region35: #{attention_forward.1} parent=27 // pred_region
        %p217 = scmp.lt.s32.totalorder %s12, 3
        %s218 = scalar_select %p217, %s12, 3
        %s219 = smul.addr %s218, 8
        %s220 = scalar_lea.vmem %s1, %s219
      $region36: #{attention_forward.1} parent=27 // pred_fallthru
        _
      // Predicated region
      $region37: #{attention_forward.1} parent=27 // pred_check
        %p221 = pneg %p84
      $region38: #{attention_forward.1} parent=27 // pred_check_branch
        %223 = sbr.rel (%p221) target = $region40
      $region39: #{attention_forward.1} parent=27 // pred_region
        %p224 = scmp.lt.s32.totalorder %s12, 3
        %s225 = scalar_select %p224, %s12, 3
        %s226 = scalar_lea.vmem %s2, %s225
      $region40: #{attention_forward.1} parent=27 // pred_fallthru
        _
    $region28: #{attention_forward.1} parent=5 // pred_fallthru
      _
    %p227 = scmp.le.s32.totalorder 1, %s12
    %p228 = scmp.lt.s32.totalorder %s12, 5
    %p229 = pnand %p227, %p228
    %p230 = pneg %p229
    // Predicated region
    $region41: #{attention_forward.1} parent=5 // pred_check
      _
    $region42: #{attention_forward.1} parent=5 // pred_check_branch
      %232 = sbr.rel (%p229) target = $region44
    $region43: #{attention_forward.1} parent=5 // pred_region
      %s233 = ssub.s32 %s12, 1
      %p234 = scmp.lt.s32.totalorder %s17, 3
      %s235 = scalar_select %p234, %s17, 3
      %s236 = smul.addr %s235, 8
      %s237 = scalar_lea.vmem %s0, %s236
      %p238 = pneg %p38
      %p239 = pneg %p35
      %p240 = scmp.lt.s32.totalorder %s17, 3
      %s241 = scalar_select %p240, %s17, 3
      %s242 = smul.addr %s241, 8
      %s243 = scalar_lea.vmem %s1, %s242
      %p244 = pneg %p64
      %p245 = pneg %p61
      %p246 = scmp.lt.s32.totalorder %s17, 3
      %s247 = scalar_select %p246, %s17, 3
      %s248 = scalar_lea.vmem %s2, %s247
      %p249 = pneg %p90
      %p250 = pneg %p87
      %p251 = pneg %p111
      %p252 = pneg %p108
      %p253 = pneg %p132
      %p254 = pneg %p129
      %p255 = pneg %p153
      %p256 = pneg %p150
      %p257 = pneg %p179
      %p258 = pneg %p176
      %p259 = scmp.lt.s32.totalorder %s17, 3
      %s260 = scalar_select %p259, %s17, 3
      %s261 = smul.addr %s260, 8
      %s262 = scalar_lea.vmem %s6, %s261
      %p263 = scmp.lt.s32.totalorder %s17, 3
      %s264 = scalar_select %p263, %s17, 3
      %s265 = smul.addr %s264, 8
      %s266 = scalar_lea.vmem %s0, %s265
      %p267 = scmp.lt.s32.totalorder %s17, 3
      %s268 = scalar_select %p267, %s17, 3
      %s269 = smul.addr %s268, 8
      %s270 = scalar_lea.vmem %s1, %s269
      %p271 = scmp.lt.s32.totalorder %s17, 3
      %s272 = scalar_select %p271, %s17, 3
      %s273 = scalar_lea.vmem %s2, %s272
      %p274 = scmp.lt.s32.totalorder %s17, 3
      %s275 = scalar_select %p274, %s17, 3
      %s276 = smul.addr %s275, 8
      %s277 = scalar_lea.vmem %s6, %s276
      %v278 = vld [vmem:[%s266] sm:$0xff]
      %v279 = vld [vmem:[%s270] sm:$0xff]
      %v280 = vld [vmem:[%s273] sm:$0x1]
      %v281 = vld [vmem:[%s3] sm:$0xff]
      %v282 = vld [vmem:[%s3 + $0x8] sm:$0xff]
      %v283 = vld [vmem:[%s3 + $0x10] sm:$0x1]
      %v284 = vld [vmem:[%s4] sm:$0xff]
      %v285 = vld [vmem:[%s4 + $0x8] sm:$0xff]
      %v286 = vld [vmem:[%s4 + $0x10] sm:$0xff]
      %v287 = vld [vmem:[%s4 + $0x18] sm:$0xff]
      %v288 = vld [vmem:[%s4 + $0x20] sm:$0xff]
      %v289 = vld [vmem:[%s4 + $0x28] sm:$0xff]
      %v290 = vld [vmem:[%s4 + $0x30] sm:$0xff]
      %v291 = vld [vmem:[%s4 + $0x38] sm:$0xff]
      %v292 = vld [vmem:[%s4 + $0x40] sm:$0xff]
      %v293 = vld [vmem:[%s4 + $0x48] sm:$0xff]
      %v294 = vld [vmem:[%s4 + $0x50] sm:$0xff]
      %v295 = vld [vmem:[%s4 + $0x58] sm:$0xff]
      %v296 = vld [vmem:[%s4 + $0x60] sm:$0x1]
      %v297 = vld [vmem:[%s5] sm:$0xff]
      %v298 = vld [vmem:[%s5 + $0x8] sm:$0xff]
      %v299 = vld [vmem:[%s5 + $0x10] sm:$0xff]
      %v300 = vld [vmem:[%s5 + $0x18] sm:$0xff]
      %v301 = vld [vmem:[%s5 + $0x20] sm:$0xff]
      %v302 = vld [vmem:[%s5 + $0x28] sm:$0xff]
      %v303 = vld [vmem:[%s5 + $0x30] sm:$0xff]
      %v304 = vld [vmem:[%s5 + $0x38] sm:$0xff]
      %v305 = vld [vmem:[%s5 + $0x40] sm:$0x1]
      %v306 = vperm.slane %v283, 0
      %vm307 = vcmask 130048
      %v309 = vsel %vm307, %v278, 0
      %v312 = vsel %vm307, %v279, 0
      %314 = vmatpush.msra.mxu0 0.0
      %315 = vmatpush.msra.mxu0 0.0
      %316 = vmatpush.msra.mxu0 0.0
      %317 = vmatpush.msra.mxu0 0.0
      %318 = vmatpush.msra.mxu0 0.0
      %319 = vmatpush.msra.mxu0 0.0
      %320 = vmatpush.msra.mxu0 0.0
      %321 = vmatpush.msra.mxu0 0.0
      %322 = vmatpush.msra.mxu0 0.0
      %323 = vmatpush.msra.mxu0 0.0
      %324 = vmatpush.msra.mxu0 0.0
      %325 = vmatpush.msra.mxu0 0.0
      %326 = vmatpush.msra.mxu0 0.0
      %327 = vmatpush.msra.mxu0 0.0
      %328 = vmatpush.msra.mxu0 %v282
      %329 = vmatpush.msra.mxu0 %v281
      %330 = vmatmul.f32.gmra.mxu0 %v309
      %v331 = vpop.f32.mrf.mxu0
      %v332 = vadd.f32 %v306, %v331
      %333 = vmatmul.f32.gmra.mxu0 %v312
      %v334 = vpop.f32.mrf.mxu0
      %v335 = vadd.f32 %v306, %v334
      %336 = vdwg.mxu0
      %vm337 = vcmask 261120
      %v339 = vsel %vm337, %v280, 0
      %341 = vmatpush.msra.mxu0 0.0
      %342 = vmatpush.msra.mxu0 0.0
      %343 = vmatpush.msra.mxu0 0.0
      %344 = vmatpush.msra.mxu0 0.0
      %345 = vmatpush.msra.mxu0 0.0
      %346 = vmatpush.msra.mxu0 0.0
      %347 = vmatpush.msra.mxu0 0.0
      %348 = vmatpush.msra.mxu0 0.0
      %349 = vmatpush.msra.mxu0 0.0
      %350 = vmatpush.msra.mxu0 0.0
      %351 = vmatpush.msra.mxu0 0.0
      %352 = vmatpush.msra.mxu0 0.0
      %353 = vmatpush.msra.mxu0 %v287
      %354 = vmatpush.msra.mxu0 %v286
      %355 = vmatpush.msra.mxu0 %v285
      %356 = vmatpush.msra.mxu0 %v284
      %357 = vmatmul.f32.gmra.mxu0 %v339
      %v358 = vpop.f32.mrf.mxu0
      %v359 = vadd.f32 0.0, %v358
      %360 = vdwg.mxu0
      %v361 = vadd.f32 %v332, %v359
      %v362 = vtanh.pop %v361
      %vm363 = vcmask 253952
      %364 = vst.msk [vmem:[#allocation2] sm:$0x1] %vm363, %v362
      %v366 = vsel %vm337, %v362, 0
      %368 = vmatpush.msra.mxu0 0.0
      %369 = vmatpush.msra.mxu0 0.0
      %370 = vmatpush.msra.mxu0 0.0
      %371 = vmatpush.msra.mxu0 0.0
      %372 = vmatpush.msra.mxu0 0.0
      %373 = vmatpush.msra.mxu0 0.0
      %374 = vmatpush.msra.mxu0 0.0
      %375 = vmatpush.msra.mxu0 0.0
      %376 = vmatpush.msra.mxu0 0.0
      %377 = vmatpush.msra.mxu0 0.0
      %378 = vmatpush.msra.mxu0 0.0
      %379 = vmatpush.msra.mxu0 0.0
      %380 = vmatpush.msra.mxu0 %v287
      %381 = vmatpush.msra.mxu0 %v286
      %382 = vmatpush.msra.mxu0 %v285
      %383 = vmatpush.msra.mxu0 %v284
      %384 = vmatmul.f32.gmra.mxu0 %v366
      %v385 = vpop.f32.mrf.mxu0
      %v386 = vadd.f32 0.0, %v385
      %387 = vdwg.mxu0
      %v389 = vrot.slane %v386, 7
      %v391 = vadd.f32 %v332, %v389
      %v392 = vtanh.pop %v391
      %vm393 = vcmask 254977
      %394 = vst.msk [vmem:[#allocation2] sm:$0x2] %vm393, %v392
      %v396 = vrot.slane %v392, 1
      %v397 = vsel %vm337, %v396, 0
      %399 = vmatpush.msra.mxu0 0.0
      %400 = vmatpush.msra.mxu0 0.0
      %401 = vmatpush.msra.mxu0 0.0
      %402 = vmatpush.msra.mxu0 0.0
      %403 = vmatpush.msra.mxu0 0.0
      %404 = vmatpush.msra.mxu0 0.0
      %405 = vmatpush.msra.mxu0 0.0
      %406 = vmatpush.msra.mxu0 0.0
      %407 = vmatpush.msra.mxu0 0.0
      %408 = vmatpush.msra.mxu0 0.0
      %409 = vmatpush.msra.mxu0 0.0
      %410 = vmatpush.msra.mxu0 0.0
      %411 = vmatpush.msra.mxu0 %v287
      %412 = vmatpush.msra.mxu0 %v286
      %413 = vmatpush.msra.mxu0 %v285
      %414 = vmatpush.msra.mxu0 %v284
      %415 = vmatmul.f32.gmra.mxu0 %v397
      %v416 = vpop.f32.mrf.mxu0
      %v417 = vadd.f32 0.0, %v416
      %418 = vdwg.mxu0
      %v420 = vrot.slane %v417, 6
      %v422 = vadd.f32 %v332, %v420
      %v423 = vtanh.pop %v422
      %vm424 = vcmask 256002
      %425 = vst.msk [vmem:[#allocation2] sm:$0x4] %vm424, %v423
      %v427 = vrot.slane %v423, 2
      %v428 = vsel %vm337, %v427, 0
      %430 = vmatpush.msra.mxu0 0.0
      %431 = vmatpush.msra.mxu0 0.0
      %432 = vmatpush.msra.mxu0 0.0
      %433 = vmatpush.msra.mxu0 0.0
      %434 = vmatpush.msra.mxu0 0.0
      %435 = vmatpush.msra.mxu0 0.0
      %436 = vmatpush.msra.mxu0 0.0
      %437 = vmatpush.msra.mxu0 0.0
      %438 = vmatpush.msra.mxu0 0.0
      %439 = vmatpush.msra.mxu0 0.0
      %440 = vmatpush.msra.mxu0 0.0
      %441 = vmatpush.msra.mxu0 0.0
      %442 = vmatpush.msra.mxu0 %v287
      %443 = vmatpush.msra.mxu0 %v286
      %444 = vmatpush.msra.mxu0 %v285
      %445 = vmatpush.msra.mxu0 %v284
      %446 = vmatmul.f32.gmra.mxu0 %v428
      %v447 = vpop.f32.mrf.mxu0
      %v448 = vadd.f32 0.0, %v447
      %449 = vdwg.mxu0
      %v451 = vrot.slane %v448, 5
      %v453 = vadd.f32 %v332, %v451
      %v454 = vtanh.pop %v453
      %vm455 = vcmask 257027
      %456 = vst.msk [vmem:[#allocation2] sm:$0x8] %vm455, %v454
      %v458 = vrot.slane %v454, 3
      %v459 = vsel %vm337, %v458, 0
      %461 = vmatpush.msra.mxu0 0.0
      %462 = vmatpush.msra.mxu0 0.0
      %463 = vmatpush.msra.mxu0 0.0
      %464 = vmatpush.msra.mxu0 0.0
      %465 = vmatpush.msra.mxu0 0.0
      %466 = vmatpush.msra.mxu0 0.0
      %467 = vmatpush.msra.mxu0 0.0
      %468 = vmatpush.msra.mxu0 0.0
      %469 = vmatpush.msra.mxu0 0.0
      %470 = vmatpush.msra.mxu0 0.0
      %471 = vmatpush.msra.mxu0 0.0
      %472 = vmatpush.msra.mxu0 0.0
      %473 = vmatpush.msra.mxu0 %v287
      %474 = vmatpush.msra.mxu0 %v286
      %475 = vmatpush.msra.mxu0 %v285
      %476 = vmatpush.msra.mxu0 %v284
      %477 = vmatmul.f32.gmra.mxu0 %v459
      %v478 = vpop.f32.mrf.mxu0
      %v479 = vadd.f32 0.0, %v478
      %480 = vdwg.mxu0
      %v482 = vrot.slane %v479, 4
      %v484 = vadd.f32 %v332, %v482
      %v485 = vtanh.pop %v484
      %vm486 = vcmask 258052
      %487 = vst.msk [vmem:[#allocation2] sm:$0x10] %vm486, %v485
      %v489 = vrot.slane %v485, 4
      %v490 = vsel %vm337, %v489, 0
      %492 = vmatpush.msra.mxu0 0.0
      %493 = vmatpush.msra.mxu0 0.0
      %494 = vmatpush.msra.mxu0 0.0
      %495 = vmatpush.msra.mxu0 0.0
      %496 = vmatpush.msra.mxu0 0.0
      %497 = vmatpush.msra.mxu0 0.0
      %498 = vmatpush.msra.mxu0 0.0
      %499 = vmatpush.msra.mxu0 0.0
      %500 = vmatpush.msra.mxu0 0.0
      %501 = vmatpush.msra.mxu0 0.0
      %502 = vmatpush.msra.mxu0 0.0
      %503 = vmatpush.msra.mxu0 0.0
      %504 = vmatpush.msra.mxu0 %v287
      %505 = vmatpush.msra.mxu0 %v286
      %506 = vmatpush.msra.mxu0 %v285
      %507 = vmatpush.msra.mxu0 %v284
      %508 = vmatmul.f32.gmra.mxu0 %v490
      %v509 = vpop.f32.mrf.mxu0
      %v510 = vadd.f32 0.0, %v509
      %511 = vdwg.mxu0
      %v513 = vrot.slane %v510, 3
      %v515 = vadd.f32 %v332, %v513
      %v516 = vtanh.pop %v515
      %vm517 = vcmask 259077
      %518 = vst.msk [vmem:[#allocation2] sm:$0x20] %vm517, %v516
      %v520 = vrot.slane %v516, 5
      %v521 = vsel %vm337, %v520, 0
      %523 = vmatpush.msra.mxu0 0.0
      %524 = vmatpush.msra.mxu0 0.0
      %525 = vmatpush.msra.mxu0 0.0
      %526 = vmatpush.msra.mxu0 0.0
      %527 = vmatpush.msra.mxu0 0.0
      %528 = vmatpush.msra.mxu0 0.0
      %529 = vmatpush.msra.mxu0 0.0
      %530 = vmatpush.msra.mxu0 0.0
      %531 = vmatpush.msra.mxu0 0.0
      %532 = vmatpush.msra.mxu0 0.0
      %533 = vmatpush.msra.mxu0 0.0
      %534 = vmatpush.msra.mxu0 0.0
      %535 = vmatpush.msra.mxu0 %v287
      %536 = vmatpush.msra.mxu0 %v286
      %537 = vmatpush.msra.mxu0 %v285
      %538 = vmatpush.msra.mxu0 %v284
      %539 = vmatmul.f32.gmra.mxu0 %v521
      %v540 = vpop.f32.mrf.mxu0
      %v541 = vadd.f32 0.0, %v540
      %542 = vdwg.mxu0
      %v544 = vrot.slane %v541, 2
      %v546 = vadd.f32 %v332, %v544
      %v547 = vtanh.pop %v546
      %vm548 = vcmask 260102
      %549 = vst.msk [vmem:[#allocation2] sm:$0x40] %vm548, %v547
      %v551 = vrot.slane %v547, 6
      %v552 = vsel %vm337, %v551, 0
      %554 = vmatpush.msra.mxu0 0.0
      %555 = vmatpush.msra.mxu0 0.0
      %556 = vmatpush.msra.mxu0 0.0
      %557 = vmatpush.msra.mxu0 0.0
      %558 = vmatpush.msra.mxu0 0.0
      %559 = vmatpush.msra.mxu0 0.0
      %560 = vmatpush.msra.mxu0 0.0
      %561 = vmatpush.msra.mxu0 0.0
      %562 = vmatpush.msra.mxu0 0.0
      %563 = vmatpush.msra.mxu0 0.0
      %564 = vmatpush.msra.mxu0 0.0
      %565 = vmatpush.msra.mxu0 0.0
      %566 = vmatpush.msra.mxu0 %v287
      %567 = vmatpush.msra.mxu0 %v286
      %568 = vmatpush.msra.mxu0 %v285
      %569 = vmatpush.msra.mxu0 %v284
      %570 = vmatmul.f32.gmra.mxu0 %v552
      %v571 = vpop.f32.mrf.mxu0
      %v572 = vadd.f32 0.0, %v571
      %573 = vdwg.mxu0
      %v575 = vrot.slane %v572, 1
      %v577 = vadd.f32 %v332, %v575
      %v578 = vtanh.pop %v577
      %vm579 = vcmask 261127
      %580 = vst.msk [vmem:[#allocation2] sm:$0x80] %vm579, %v578
      %v582 = vrot.slane %v578, 7
      %v583 = vsel %vm337, %v582, 0
      %585 = vmatpush.msra.mxu0 0.0
      %586 = vmatpush.msra.mxu0 0.0
      %587 = vmatpush.msra.mxu0 0.0
      %588 = vmatpush.msra.mxu0 0.0
      %589 = vmatpush.msra.mxu0 0.0
      %590 = vmatpush.msra.mxu0 0.0
      %591 = vmatpush.msra.mxu0 0.0
      %592 = vmatpush.msra.mxu0 0.0
      %593 = vmatpush.msra.mxu0 0.0
      %594 = vmatpush.msra.mxu0 0.0
      %595 = vmatpush.msra.mxu0 0.0
      %596 = vmatpush.msra.mxu0 0.0
      %597 = vmatpush.msra.mxu0 %v291
      %598 = vmatpush.msra.mxu0 %v290
      %599 = vmatpush.msra.mxu0 %v289
      %600 = vmatpush.msra.mxu0 %v288
      %601 = vmatmul.f32.gmra.mxu0 %v583
      %v602 = vpop.f32.mrf.mxu0
      %v603 = vadd.f32 0.0, %v602
      %604 = vdwg.mxu0
      %606 = vrot.lane.b32.xlu0 %v603, 32
      %v607 = vpop.permute.xlu0 %606
      %v609 = vadd.f32 %v335, %v607
      %v610 = vtanh.pop %v609
      %612 = vrot.lane.b32.xlu0 %v610, 96
      %v613 = vpop.permute.xlu0 %612
      %615 = vst.msk [vmem:[#allocation3] sm:$0x1] %vm363, %v613
      %v616 = vsel %vm337, %v613, 0
      %618 = vmatpush.msra.mxu0 0.0
      %619 = vmatpush.msra.mxu0 0.0
      %620 = vmatpush.msra.mxu0 0.0
      %621 = vmatpush.msra.mxu0 0.0
      %622 = vmatpush.msra.mxu0 0.0
      %623 = vmatpush.msra.mxu0 0.0
      %624 = vmatpush.msra.mxu0 0.0
      %625 = vmatpush.msra.mxu0 0.0
      %626 = vmatpush.msra.mxu0 0.0
      %627 = vmatpush.msra.mxu0 0.0
      %628 = vmatpush.msra.mxu0 0.0
      %629 = vmatpush.msra.mxu0 0.0
      %630 = vmatpush.msra.mxu0 %v291
      %631 = vmatpush.msra.mxu0 %v290
      %632 = vmatpush.msra.mxu0 %v289
      %633 = vmatpush.msra.mxu0 %v288
      %634 = vmatmul.f32.gmra.mxu0 %v616
      %v635 = vpop.f32.mrf.mxu0
      %v636 = vadd.f32 0.0, %v635
      %637 = vdwg.mxu0
      %v639 = vrot.slane %v636, 7
      %640 = vrot.lane.b32.xlu0 %v639, 32
      %v641 = vpop.permute.xlu0 %640
      %v643 = vadd.f32 %v335, %v641
      %v644 = vtanh.pop %v643
      %646 = vrot.lane.b32.xlu0 %v644, 96
      %v647 = vpop.permute.xlu0 %646
      %649 = vst.msk [vmem:[#allocation3] sm:$0x2] %vm393, %v647
      %v650 = vrot.slane %v644, 1
      %651 = vrot.lane.b32.xlu0 %v650, 96
      %v652 = vpop.permute.xlu0 %651
      %v653 = vsel %vm337, %v652, 0
      %655 = vmatpush.msra.mxu0 0.0
      %656 = vmatpush.msra.mxu0 0.0
      %657 = vmatpush.msra.mxu0 0.0
      %658 = vmatpush.msra.mxu0 0.0
      %659 = vmatpush.msra.mxu0 0.0
      %660 = vmatpush.msra.mxu0 0.0
      %661 = vmatpush.msra.mxu0 0.0
      %662 = vmatpush.msra.mxu0 0.0
      %663 = vmatpush.msra.mxu0 0.0
      %664 = vmatpush.msra.mxu0 0.0
      %665 = vmatpush.msra.mxu0 0.0
      %666 = vmatpush.msra.mxu0 0.0
      %667 = vmatpush.msra.mxu0 %v291
      %668 = vmatpush.msra.mxu0 %v290
      %669 = vmatpush.msra.mxu0 %v289
      %670 = vmatpush.msra.mxu0 %v288
      %671 = vmatmul.f32.gmra.mxu0 %v653
      %v672 = vpop.f32.mrf.mxu0
      %v673 = vadd.f32 0.0, %v672
      %674 = vdwg.mxu0
      %v676 = vrot.slane %v673, 6
      %677 = vrot.lane.b32.xlu0 %v676, 32
      %v678 = vpop.permute.xlu0 %677
      %v680 = vadd.f32 %v335, %v678
      %v681 = vtanh.pop %v680
      %683 = vrot.lane.b32.xlu0 %v681, 96
      %v684 = vpop.permute.xlu0 %683
      %686 = vst.msk [vmem:[#allocation3] sm:$0x4] %vm424, %v684
      %v687 = vrot.slane %v681, 2
      %688 = vrot.lane.b32.xlu0 %v687, 96
      %v689 = vpop.permute.xlu0 %688
      %v690 = vsel %vm337, %v689, 0
      %692 = vmatpush.msra.mxu0 0.0
      %693 = vmatpush.msra.mxu0 0.0
      %694 = vmatpush.msra.mxu0 0.0
      %695 = vmatpush.msra.mxu0 0.0
      %696 = vmatpush.msra.mxu0 0.0
      %697 = vmatpush.msra.mxu0 0.0
      %698 = vmatpush.msra.mxu0 0.0
      %699 = vmatpush.msra.mxu0 0.0
      %700 = vmatpush.msra.mxu0 0.0
      %701 = vmatpush.msra.mxu0 0.0
      %702 = vmatpush.msra.mxu0 0.0
      %703 = vmatpush.msra.mxu0 0.0
      %704 = vmatpush.msra.mxu0 %v291
      %705 = vmatpush.msra.mxu0 %v290
      %706 = vmatpush.msra.mxu0 %v289
      %707 = vmatpush.msra.mxu0 %v288
      %708 = vmatmul.f32.gmra.mxu0 %v690
      %v709 = vpop.f32.mrf.mxu0
      %v710 = vadd.f32 0.0, %v709
      %711 = vdwg.mxu0
      %v713 = vrot.slane %v710, 5
      %714 = vrot.lane.b32.xlu0 %v713, 32
      %v715 = vpop.permute.xlu0 %714
      %v717 = vadd.f32 %v335, %v715
      %v718 = vtanh.pop %v717
      %720 = vrot.lane.b32.xlu0 %v718, 96
      %v721 = vpop.permute.xlu0 %720
      %723 = vst.msk [vmem:[#allocation3] sm:$0x8] %vm455, %v721
      %v724 = vrot.slane %v718, 3
      %725 = vrot.lane.b32.xlu0 %v724, 96
      %v726 = vpop.permute.xlu0 %725
      %v727 = vsel %vm337, %v726, 0
      %729 = vmatpush.msra.mxu0 0.0
      %730 = vmatpush.msra.mxu0 0.0
      %731 = vmatpush.msra.mxu0 0.0
      %732 = vmatpush.msra.mxu0 0.0
      %733 = vmatpush.msra.mxu0 0.0
      %734 = vmatpush.msra.mxu0 0.0
      %735 = vmatpush.msra.mxu0 0.0
      %736 = vmatpush.msra.mxu0 0.0
      %737 = vmatpush.msra.mxu0 0.0
      %738 = vmatpush.msra.mxu0 0.0
      %739 = vmatpush.msra.mxu0 0.0
      %740 = vmatpush.msra.mxu0 0.0
      %741 = vmatpush.msra.mxu0 %v291
      %742 = vmatpush.msra.mxu0 %v290
      %743 = vmatpush.msra.mxu0 %v289
      %744 = vmatpush.msra.mxu0 %v288
      %745 = vmatmul.f32.gmra.mxu0 %v727
      %v746 = vpop.f32.mrf.mxu0
      %v747 = vadd.f32 0.0, %v746
      %748 = vdwg.mxu0
      %v750 = vrot.slane %v747, 4
      %751 = vrot.lane.b32.xlu0 %v750, 32
      %v752 = vpop.permute.xlu0 %751
      %v754 = vadd.f32 %v335, %v752
      %v755 = vtanh.pop %v754
      %757 = vrot.lane.b32.xlu0 %v755, 96
      %v758 = vpop.permute.xlu0 %757
      %760 = vst.msk [vmem:[#allocation3] sm:$0x10] %vm486, %v758
      %v761 = vrot.slane %v755, 4
      %762 = vrot.lane.b32.xlu0 %v761, 96
      %v763 = vpop.permute.xlu0 %762
      %v764 = vsel %vm337, %v763, 0
      %766 = vmatpush.msra.mxu0 0.0
      %767 = vmatpush.msra.mxu0 0.0
      %768 = vmatpush.msra.mxu0 0.0
      %769 = vmatpush.msra.mxu0 0.0
      %770 = vmatpush.msra.mxu0 0.0
      %771 = vmatpush.msra.mxu0 0.0
      %772 = vmatpush.msra.mxu0 0.0
      %773 = vmatpush.msra.mxu0 0.0
      %774 = vmatpush.msra.mxu0 0.0
      %775 = vmatpush.msra.mxu0 0.0
      %776 = vmatpush.msra.mxu0 0.0
      %777 = vmatpush.msra.mxu0 0.0
      %778 = vmatpush.msra.mxu0 %v291
      %779 = vmatpush.msra.mxu0 %v290
      %780 = vmatpush.msra.mxu0 %v289
      %781 = vmatpush.msra.mxu0 %v288
      %782 = vmatmul.f32.gmra.mxu0 %v764
      %v783 = vpop.f32.mrf.mxu0
      %v784 = vadd.f32 0.0, %v783
      %785 = vdwg.mxu0
      %v787 = vrot.slane %v784, 3
      %788 = vrot.lane.b32.xlu0 %v787, 32
      %v789 = vpop.permute.xlu0 %788
      %v791 = vadd.f32 %v335, %v789
      %v792 = vtanh.pop %v791
      %794 = vrot.lane.b32.xlu0 %v792, 96
      %v795 = vpop.permute.xlu0 %794
      %797 = vst.msk [vmem:[#allocation3] sm:$0x20] %vm517, %v795
      %v798 = vrot.slane %v792, 5
      %799 = vrot.lane.b32.xlu0 %v798, 96
      %v800 = vpop.permute.xlu0 %799
      %v801 = vsel %vm337, %v800, 0
      %803 = vmatpush.msra.mxu0 0.0
      %804 = vmatpush.msra.mxu0 0.0
      %805 = vmatpush.msra.mxu0 0.0
      %806 = vmatpush.msra.mxu0 0.0
      %807 = vmatpush.msra.mxu0 0.0
      %808 = vmatpush.msra.mxu0 0.0
      %809 = vmatpush.msra.mxu0 0.0
      %810 = vmatpush.msra.mxu0 0.0
      %811 = vmatpush.msra.mxu0 0.0
      %812 = vmatpush.msra.mxu0 0.0
      %813 = vmatpush.msra.mxu0 0.0
      %814 = vmatpush.msra.mxu0 0.0
      %815 = vmatpush.msra.mxu0 %v291
      %816 = vmatpush.msra.mxu0 %v290
      %817 = vmatpush.msra.mxu0 %v289
      %818 = vmatpush.msra.mxu0 %v288
      %819 = vmatmul.f32.gmra.mxu0 %v801
      %v820 = vpop.f32.mrf.mxu0
      %v821 = vadd.f32 0.0, %v820
      %822 = vdwg.mxu0
      %v824 = vrot.slane %v821, 2
      %825 = vrot.lane.b32.xlu0 %v824, 32
      %v826 = vpop.permute.xlu0 %825
      %v828 = vadd.f32 %v335, %v826
      %v829 = vtanh.pop %v828
      %831 = vrot.lane.b32.xlu0 %v829, 96
      %v832 = vpop.permute.xlu0 %831
      %834 = vst.msk [vmem:[#allocation3] sm:$0x40] %vm548, %v832
      %v835 = vrot.slane %v829, 6
      %836 = vrot.lane.b32.xlu0 %v835, 96
      %v837 = vpop.permute.xlu0 %836
      %v838 = vsel %vm337, %v837, 0
      %840 = vmatpush.msra.mxu0 0.0
      %841 = vmatpush.msra.mxu0 0.0
      %842 = vmatpush.msra.mxu0 0.0
      %843 = vmatpush.msra.mxu0 0.0
      %844 = vmatpush.msra.mxu0 0.0
      %845 = vmatpush.msra.mxu0 0.0
      %846 = vmatpush.msra.mxu0 0.0
      %847 = vmatpush.msra.mxu0 0.0
      %848 = vmatpush.msra.mxu0 0.0
      %849 = vmatpush.msra.mxu0 0.0
      %850 = vmatpush.msra.mxu0 0.0
      %851 = vmatpush.msra.mxu0 0.0
      %852 = vmatpush.msra.mxu0 %v291
      %853 = vmatpush.msra.mxu0 %v290
      %854 = vmatpush.msra.mxu0 %v289
      %855 = vmatpush.msra.mxu0 %v288
      %856 = vmatmul.f32.gmra.mxu0 %v838
      %v857 = vpop.f32.mrf.mxu0
      %v858 = vadd.f32 0.0, %v857
      %859 = vdwg.mxu0
      %v861 = vrot.slane %v858, 1
      %862 = vrot.lane.b32.xlu0 %v861, 32
      %v863 = vpop.permute.xlu0 %862
      %v865 = vadd.f32 %v335, %v863
      %v866 = vtanh.pop %v865
      %868 = vrot.lane.b32.xlu0 %v866, 96
      %v869 = vpop.permute.xlu0 %868
      %871 = vst.msk [vmem:[#allocation3] sm:$0x80] %vm579, %v869
      %v872 = vld [vmem:[#allocation2] sm:$0xff]
      %v873 = vld [vmem:[#allocation3] sm:$0xff]
      %v874 = vperm.slane %v296, 0
      %v876 = vsel %vm337, %v872, 0
      %878 = vmatpush.msra.mxu0 0.0
      %879 = vmatpush.msra.mxu0 0.0
      %880 = vmatpush.msra.mxu0 0.0
      %881 = vmatpush.msra.mxu0 0.0
      %882 = vmatpush.msra.mxu0 0.0
      %883 = vmatpush.msra.mxu0 0.0
      %884 = vmatpush.msra.mxu0 0.0
      %885 = vmatpush.msra.mxu0 0.0
      %886 = vmatpush.msra.mxu0 0.0
      %887 = vmatpush.msra.mxu0 0.0
      %888 = vmatpush.msra.mxu0 0.0
      %889 = vmatpush.msra.mxu0 0.0
      %890 = vmatpush.msra.mxu0 %v295
      %891 = vmatpush.msra.mxu0 %v294
      %892 = vmatpush.msra.mxu0 %v293
      %893 = vmatpush.msra.mxu0 %v292
      %894 = vmatmul.f32.gmra.mxu0 %v876
      %v895 = vpop.f32.mrf.mxu0
      %v896 = vadd.f32 %v874, %v895
      %897 = vdwg.mxu0
      %v899 = vsel %vm337, %v873, 0
      %v902 = vsel %vm337, %v896, 0
      %904 = vmatpush.xpose.msra.mxu0 0.0
      %905 = vmatpush.xpose.msra.mxu0 0.0
      %906 = vmatpush.xpose.msra.mxu0 0.0
      %907 = vmatpush.xpose.msra.mxu0 0.0
      %908 = vmatpush.xpose.msra.mxu0 0.0
      %909 = vmatpush.xpose.msra.mxu0 0.0
      %910 = vmatpush.xpose.msra.mxu0 0.0
      %911 = vmatpush.xpose.msra.mxu0 0.0
      %912 = vmatpush.xpose.msra.mxu0 0.0
      %913 = vmatpush.xpose.msra.mxu0 0.0
      %914 = vmatpush.xpose.msra.mxu0 0.0
      %915 = vmatpush.xpose.msra.mxu0 0.0
      %916 = vmatpush.xpose.msra.mxu0 0.0
      %917 = vmatpush.xpose.msra.mxu0 0.0
      %918 = vmatpush.xpose.msra.mxu0 0.0
      %919 = vmatpush.xpose.msra.mxu0 %v902
      %920 = vmatmul.f32.gmra.mxu0 %v899
      %v921 = vpop.f32.mrf.mxu0
      %v922 = vadd.f32 0.0, %v921
      %923 = vdwg.mxu0
      %vm924 = vcmask 64512
      %v925 = vsel %vm924, %v922, -inf
      %926 = vmax.xlane.f32.xlu0 %v925
      %v927 = vpop.xlane.xlu0 %926
      %v928 = vsub.f32 %v922, %v927
      %v929 = vmul.f32 %v928, 1.442695
      %v930 = vpow.pop %v929
      %v931 = vsel %vm924, %v930, 0.0
      %932 = vadd.xlane.f32.xlu0 %v931
      %v933 = vpop.xlane.xlu0 %932
      %v934 = vrcp.pop %v933
      %v935 = vmul.f32 %v933, %v934
      %v936 = vsub.f32 1.0, %v935
      %v937 = vmul.f32 %v934, %v936
      %v938 = vadd.f32 %v934, %v937
      %vm939 = vweird.f32 %v933
      %vm940 = vweird.f32 %v934
      %vm941 = vmor %vm939, %vm940
      %v942 = vsel %vm941, %v934, %v938
      %v943 = vand.u32 2147483647, %v933
      %vm944 = vcmp.eq.f32.partialorder %v943, 8.507059e+37
      %v945 = vand.u32 %v933, 2147483648
      %v946 = vor.u32 1.1754944e-38, %v945
      %v947 = vsel %vm944, %v946, %v942
      %v948 = vmul.f32 %v930, %v947
      %v950 = vsel %vm924, %v948, 0
      %952 = vmatpush.msra.mxu0 0.0
      %953 = vmatpush.msra.mxu0 0.0
      %954 = vmatpush.msra.mxu0 0.0
      %955 = vmatpush.msra.mxu0 0.0
      %956 = vmatpush.msra.mxu0 0.0
      %957 = vmatpush.msra.mxu0 0.0
      %958 = vmatpush.msra.mxu0 0.0
      %959 = vmatpush.msra.mxu0 0.0
      %960 = vmatpush.msra.mxu0 0.0
      %961 = vmatpush.msra.mxu0 0.0
      %962 = vmatpush.msra.mxu0 0.0
      %963 = vmatpush.msra.mxu0 0.0
      %964 = vmatpush.msra.mxu0 0.0
      %965 = vmatpush.msra.mxu0 0.0
      %966 = vmatpush.msra.mxu0 0.0
      %967 = vmatpush.msra.mxu0 %v872
      %968 = vmatmul.f32.gmra.mxu0 %v950
      %v969 = vpop.f32.mrf.mxu0
      %v970 = vadd.f32 0.0, %v969
      %971 = vdwg.mxu0
      %973 = vrot.lane.b32.xlu0 %v970, 32
      %v974 = vpop.permute.xlu0 %973
      %v976 = vsel %vm337, %v873, %v974
      %v977 = vperm.slane %v305, 0
      %vm978 = vcmask 523264
      %v980 = vsel %vm978, %v976, 0
      %982 = vmatpush.msra.mxu0 0.0
      %983 = vmatpush.msra.mxu0 0.0
      %984 = vmatpush.msra.mxu0 0.0
      %985 = vmatpush.msra.mxu0 0.0
      %986 = vmatpush.msra.mxu0 0.0
      %987 = vmatpush.msra.mxu0 0.0
      %988 = vmatpush.msra.mxu0 0.0
      %989 = vmatpush.msra.mxu0 0.0
      %990 = vmatpush.msra.mxu0 %v304
      %991 = vmatpush.msra.mxu0 %v303
      %992 = vmatpush.msra.mxu0 %v302
      %993 = vmatpush.msra.mxu0 %v301
      %994 = vmatpush.msra.mxu0 %v300
      %995 = vmatpush.msra.mxu0 %v299
      %996 = vmatpush.msra.mxu0 %v298
      %997 = vmatpush.msra.mxu0 %v297
      %998 = vmatmul.f32.gmra.mxu0 %v980
      %v999 = vpop.f32.mrf.mxu0
      %v1000 = vadd.f32 %v977, %v999
      %1001 = vdwg.mxu0
      %1002 = vrot.lane.b32.xlu0 %v948, 16
      %v1003 = vpop.permute.xlu0 %1002
      %v1005 = vsel %vm307, %v1000, %v1003
      %vm1006 = vcmask 195584
      %1007 = vst.msk [vmem:[%s277] sm:$0xff] %vm1006, %v1005
      %p1008 = scmp.lt.s32.totalorder %s17, 3
      %s1009 = scalar_select %p1008, %s17, 3
      %s1010 = smul.addr %s1009, 8
      %s1011 = scalar_lea.vmem %s6, %s1010
      // Predicated region
      $region45: #{attention_forward.1} parent=43 // pred_check
        %p1012 = pneg %p176
      $region46: #{attention_forward.1} parent=43 // pred_check_branch
        %1014 = sbr.rel (%p1012) target = $region48
      $region47: #{attention_forward.1} parent=43 // pred_region
        _
      $region48: #{attention_forward.1} parent=43 // pred_fallthru
        _
    $region44: #{attention_forward.1} parent=5 // pred_fallthru
      _
    %p1015 = scmp.le.s32.totalorder 2, %s12
    // Predicated region
    $region49: #{attention_forward.1} parent=5 // pred_check
      %p1016 = pneg %p1015
    $region50: #{attention_forward.1} parent=5 // pred_check_branch
      %1018 = sbr.rel (%p1016) target = $region52
    $region51: #{attention_forward.1} parent=5 // pred_region
      %s1019 = ssub.s32 %s12, 2
      // Predicated region
      $region53: #{attention_forward.1} parent=51 // pred_check
        %p1020 = pneg %p182
      $region54: #{attention_forward.1} parent=51 // pred_check_branch
        %1022 = sbr.rel (%p1020) target = $region56
      $region55: #{attention_forward.1} parent=51 // pred_region
        %p1023 = scmp.lt.s32.totalorder %s18, 3
        %s1024 = scalar_select %p1023, %s18, 3
        %s1025 = smul.addr %s1024, 8
        %s1026 = scalar_lea.vmem %s6, %s1025
      $region56: #{attention_forward.1} parent=51 // pred_fallthru
        _
    $region52: #{attention_forward.1} parent=5 // pred_fallthru
      _
  $region6: #{attention_forward.1} parent=0 // loop_footer
    %s16 = sadd.s32 1, %s12
  $region7: #{attention_forward.1} parent=0 // loop_footer_branch
    %11 = sbr.rel target = $region3
  $region8: #{attention_forward.1} parent=0 // loop_exit
    _

</llo_original>
